<compile_context>
chip_gen: v7x
topology: tpu7x:2x2x1
jax: 0.10.0
libtpu: 0.0.40
codegen_flags: <defaults>
</compile_context>

<pallas_src>
import functools

import jax
import jax.numpy as jnp
from jax.experimental import pallas as pl
from jax.experimental.pallas import tpu as pltpu


def _hdr_loss_kernel(x_ref, o_ref, *, gamma, pallet_inertia):
    # x_ref: (3, P, n) float32 -- channel-major pallet.
    r = x_ref[0]                                    # (P, n)
    g = x_ref[1]
    b = x_ref[2]
    P, n = r.shape

    inv_inertia = jnp.float32(1.0 / pallet_inertia)
    rc = jnp.clip(r * inv_inertia, 0.0, 1.0)
    gc = jnp.clip(g * inv_inertia, 0.0, 1.0)
    bc = jnp.clip(b * inv_inertia, 0.0, 1.0)

    # Squared luma-weighted color norms: sum_c p_c^2 * magic_c   (P, n)
    cn_sq = (jnp.float32(0.299) * rc * rc
             + jnp.float32(0.587) * gc * gc
             + jnp.float32(0.114) * bc * bc)

    # Stable per-column rank: rank[p] = #{q : v[q] < v[p]} + #{q < p : v[q] == v[p]}
    p_iota = jax.lax.broadcasted_iota(jnp.int32, (P, n), 0)
    rank = jnp.zeros((P, n), jnp.int32)
    for q in range(P):                              # statically unrolled, P is tiny
        row = cn_sq[q:q + 1, :]                     # (1, n) sublane broadcast
        less = (row < cn_sq).astype(jnp.int32)
        tie_before = jnp.logical_and(row == cn_sq, q < p_iota).astype(jnp.int32)
        rank = rank + less + tie_before

    # comp value at each element's rank; comp[r] = (r/(P-1))^gamma is a
    # compile-time Python constant, selected with compare+select.
    denom = float(P - 1) if P > 1 else 1.0
    comp_at_rank = jnp.zeros((P, n), jnp.float32)
    for rr in range(P):
        comp_val = (rr / denom) ** gamma            # evaluated at trace time
        comp_at_rank = comp_at_rank + jnp.where(
            rank == rr, jnp.float32(comp_val), jnp.float32(0.0))

    cn = jnp.sqrt(cn_sq)                            # ||sorted_pallet*sqrt(magic)||, permuted
    se = (cn - comp_at_rank) ** 2                   # squared error per element
    total = jnp.sum(se, axis=1, keepdims=True)      # (P, 1) lane reduce
    total = jnp.sum(total, axis=0, keepdims=True)   # (1, 1) sublane reduce
    o_ref[...] = total * jnp.float32(1.0 / (P * n))


def hdr_loss(pallet, weight=0.15, *, gamma=2.5, pallet_inertia=2.0):
    """pallet: (pallet_size, n_pallets, 3) float32.

    Returns (loss_raw * weight, loss_raw), matching HdrLoss.forward on a
    PixelImage whose sort_pallet() takes the default (use_pallet_target=False)
    path.
    """
    pallet = pallet.astype(jnp.float32)
    P, n, c = pallet.shape
    assert c == 3, "pallet must have 3 color channels"

    x = jnp.moveaxis(pallet, -1, 0)                 # (3, P, n): n_pallets lane-dense

    kernel = functools.partial(
        _hdr_loss_kernel, gamma=gamma, pallet_inertia=pallet_inertia)

    loss_raw = pl.pallas_call(
        kernel,
        out_shape=jax.ShapeDtypeStruct((1, 1), jnp.float32),
        grid_spec=pltpu.PrefetchScalarGridSpec(
            num_scalar_prefetch=0,
            grid=(1,),
            in_specs=[pl.BlockSpec((3, P, n), lambda i: (0, 0, 0))],
            out_specs=pl.BlockSpec((1, 1), lambda i: (0, 0)),
        ),
        compiler_params=pltpu.CompilerParams(
            dimension_semantics=("arbitrary",)),
    )(x)[0, 0]

    return loss_raw * jnp.float32(weight), loss_raw


def _hdr_loss_ref(pallet, weight, gamma=2.5, pallet_inertia=2.0):
    """Pure-JAX reference mirroring the PyTorch code literally."""
    pallet = pallet.astype(jnp.float32)
    P, n, _ = pallet.shape
    p = jnp.clip(pallet / pallet_inertia, 0.0, 1.0)
    magic = jnp.array([0.299, 0.587, 0.114], dtype=jnp.float32)
    # sort_pallet: argsort per column of the squared-magic norms, gather rows.
    cn_sq = jnp.sum(p * p * magic, axis=-1)                     # (P, n)
    idx = jnp.argsort(cn_sq, axis=0)                            # (P, n)
    sorted_p = jnp.take_along_axis(p, idx[..., None], axis=0)   # (P, n, 3)
    # HdrLoss: vector_norm(sorted_pallet * sqrt(magic), dim=-1)
    color_norms = jnp.sqrt(jnp.sum(sorted_p * sorted_p * magic, axis=-1))
    comp = (jnp.linspace(0.0, 1.0, P) ** gamma)[:, None] * jnp.ones((1, n), jnp.float32)
    loss_raw = jnp.mean((color_norms - comp) ** 2)
    return loss_raw * weight, loss_raw


if __name__ == "__main__":
    key = jax.random.PRNGKey(0)
    pallet_size, n_pallets = 16, 8          # small shapes consistent with PixelImage
    gamma, weight = 2.5, 0.15               # HdrLoss defaults
    pallet_inertia = 2.0                    # PixelImage.pallet_inertia

    pallet = jax.random.uniform(
        key, (pallet_size, n_pallets, 3), dtype=jnp.float32,
        minval=0.0, maxval=pallet_inertia)

    loss, loss_raw = hdr_loss(pallet, weight, gamma=gamma,
                              pallet_inertia=pallet_inertia)
    loss = jax.block_until_ready(loss)
    loss_raw = jax.block_until_ready(loss_raw)

    ref_loss, ref_loss_raw = _hdr_loss_ref(pallet, weight, gamma, pallet_inertia)
    assert jnp.allclose(loss_raw, ref_loss_raw, rtol=1e-4, atol=1e-6), (
        loss_raw, ref_loss_raw)
    assert jnp.allclose(loss, ref_loss, rtol=1e-4, atol=1e-6), (loss, ref_loss)

    print("KERNEL_OK")
</pallas_src>

<mosaic_0001>
module attributes {stable_mosaic.version = 11 : i64} {
  func.func @_hdr_loss_kernel(%arg0: i32, %arg1: memref<3x16x8xf32, #tpu.memory_space<vmem>>, %arg2: memref<1x1xf32, #tpu.memory_space<vmem>>) attributes {dimension_semantics = [#tpu.dimension_semantics<arbitrary>], iteration_bounds = array<i64: 1>, scalar_prefetch = 0 : i64, scratch_operands = 0 : i64, tpu.core_type = #tpu.core_type<tc>, window_params = [{pipeline_mode = #tpu.pipeline_mode<synchronous>, transform_indices = @transform_0, window_bounds = array<i64: 3, 16, 8>}, {pipeline_mode = #tpu.pipeline_mode<synchronous>, transform_indices = @transform_1, window_bounds = array<i64: 1, 1>}]} {
    %c0 = arith.constant 0 : index
    %c0_0 = arith.constant 0 : index
    %c0_1 = arith.constant 0 : index
    %0 = vector.load %arg1[%c0, %c0_0, %c0_1] : memref<3x16x8xf32, #tpu.memory_space<vmem>>, vector<1x16x8xf32>
    %1 = vector.shape_cast %0 : vector<1x16x8xf32> to vector<16x8xf32>
    %c1 = arith.constant 1 : index
    %c0_2 = arith.constant 0 : index
    %c0_3 = arith.constant 0 : index
    %2 = vector.load %arg1[%c1, %c0_2, %c0_3] : memref<3x16x8xf32, #tpu.memory_space<vmem>>, vector<1x16x8xf32>
    %3 = vector.shape_cast %2 : vector<1x16x8xf32> to vector<16x8xf32>
    %c2 = arith.constant 2 : index
    %c0_4 = arith.constant 0 : index
    %c0_5 = arith.constant 0 : index
    %4 = vector.load %arg1[%c2, %c0_4, %c0_5] : memref<3x16x8xf32, #tpu.memory_space<vmem>>, vector<1x16x8xf32>
    %5 = vector.shape_cast %4 : vector<1x16x8xf32> to vector<16x8xf32>
    %cst = arith.constant 5.000000e-01 : f32
    %6 = vector.broadcast %cst : f32 to vector<16x8xf32>
    %7 = arith.mulf %1, %6 : vector<16x8xf32>
    %cst_6 = arith.constant 0.000000e+00 : f32
    %cst_7 = arith.constant 1.000000e+00 : f32
    %8 = vector.broadcast %cst_6 : f32 to vector<16x8xf32>
    %9 = arith.maximumf %8, %7 : vector<16x8xf32>
    %10 = vector.broadcast %cst_7 : f32 to vector<16x8xf32>
    %11 = arith.minimumf %10, %9 : vector<16x8xf32>
    %cst_8 = arith.constant 5.000000e-01 : f32
    %12 = vector.broadcast %cst_8 : f32 to vector<16x8xf32>
    %13 = arith.mulf %3, %12 : vector<16x8xf32>
    %cst_9 = arith.constant 0.000000e+00 : f32
    %cst_10 = arith.constant 1.000000e+00 : f32
    %14 = vector.broadcast %cst_9 : f32 to vector<16x8xf32>
    %15 = arith.maximumf %14, %13 : vector<16x8xf32>
    %16 = vector.broadcast %cst_10 : f32 to vector<16x8xf32>
    %17 = arith.minimumf %16, %15 : vector<16x8xf32>
    %cst_11 = arith.constant 5.000000e-01 : f32
    %18 = vector.broadcast %cst_11 : f32 to vector<16x8xf32>
    %19 = arith.mulf %5, %18 : vector<16x8xf32>
    %cst_12 = arith.constant 0.000000e+00 : f32
    %cst_13 = arith.constant 1.000000e+00 : f32
    %20 = vector.broadcast %cst_12 : f32 to vector<16x8xf32>
    %21 = arith.maximumf %20, %19 : vector<16x8xf32>
    %22 = vector.broadcast %cst_13 : f32 to vector<16x8xf32>
    %23 = arith.minimumf %22, %21 : vector<16x8xf32>
    %cst_14 = arith.constant 2.990000e-01 : f32
    %24 = vector.broadcast %cst_14 : f32 to vector<16x8xf32>
    %25 = arith.mulf %24, %11 : vector<16x8xf32>
    %26 = arith.mulf %25, %11 : vector<16x8xf32>
    %cst_15 = arith.constant 5.870000e-01 : f32
    %27 = vector.broadcast %cst_15 : f32 to vector<16x8xf32>
    %28 = arith.mulf %27, %17 : vector<16x8xf32>
    %29 = arith.mulf %28, %17 : vector<16x8xf32>
    %30 = arith.addf %26, %29 : vector<16x8xf32>
    %cst_16 = arith.constant 1.140000e-01 : f32
    %31 = vector.broadcast %cst_16 : f32 to vector<16x8xf32>
    %32 = arith.mulf %31, %23 : vector<16x8xf32>
    %33 = arith.mulf %32, %23 : vector<16x8xf32>
    %34 = arith.addf %30, %33 : vector<16x8xf32>
    %35 = tpu.iota {dimensions = array<i32: 0>} : vector<16x8xi32>
    %c0_i32 = arith.constant 0 : i32
    %36 = vector.broadcast %c0_i32 : i32 to vector<16x8xi32>
    %37 = vector.extract_strided_slice %34 {offsets = [0, 0], sizes = [1, 8], strides = [1, 1]} : vector<16x8xf32> to vector<1x8xf32>
    %38 = vector.broadcast %37 : vector<1x8xf32> to vector<16x8xf32>
    %39 = arith.cmpf olt, %38, %34 : vector<16x8xf32>
    %40 = arith.extui %39 : vector<16x8xi1> to vector<16x8xi32>
    %41 = vector.broadcast %37 : vector<1x8xf32> to vector<16x8xf32>
    %42 = arith.cmpf oeq, %41, %34 : vector<16x8xf32>
    %c0_i32_17 = arith.constant 0 : i32
    %43 = vector.broadcast %c0_i32_17 : i32 to vector<16x8xi32>
    %44 = arith.cmpi sgt, %35, %43 : vector<16x8xi32>
    %45 = arith.andi %42, %44 : vector<16x8xi1>
    %46 = arith.extui %45 : vector<16x8xi1> to vector<16x8xi32>
    %47 = arith.addi %36, %40 : vector<16x8xi32>
    %48 = arith.addi %47, %46 : vector<16x8xi32>
    %49 = vector.extract_strided_slice %34 {offsets = [1, 0], sizes = [1, 8], strides = [1, 1]} : vector<16x8xf32> to vector<1x8xf32>
    %50 = vector.broadcast %49 : vector<1x8xf32> to vector<16x8xf32>
    %51 = arith.cmpf olt, %50, %34 : vector<16x8xf32>
    %52 = arith.extui %51 : vector<16x8xi1> to vector<16x8xi32>
    %53 = vector.broadcast %49 : vector<1x8xf32> to vector<16x8xf32>
    %54 = arith.cmpf oeq, %53, %34 : vector<16x8xf32>
    %c1_i32 = arith.constant 1 : i32
    %55 = vector.broadcast %c1_i32 : i32 to vector<16x8xi32>
    %56 = arith.cmpi sgt, %35, %55 : vector<16x8xi32>
    %57 = arith.andi %54, %56 : vector<16x8xi1>
    %58 = arith.extui %57 : vector<16x8xi1> to vector<16x8xi32>
    %59 = arith.addi %48, %52 : vector<16x8xi32>
    %60 = arith.addi %59, %58 : vector<16x8xi32>
    %61 = vector.extract_strided_slice %34 {offsets = [2, 0], sizes = [1, 8], strides = [1, 1]} : vector<16x8xf32> to vector<1x8xf32>
    %62 = vector.broadcast %61 : vector<1x8xf32> to vector<16x8xf32>
    %63 = arith.cmpf olt, %62, %34 : vector<16x8xf32>
    %64 = arith.extui %63 : vector<16x8xi1> to vector<16x8xi32>
    %65 = vector.broadcast %61 : vector<1x8xf32> to vector<16x8xf32>
    %66 = arith.cmpf oeq, %65, %34 : vector<16x8xf32>
    %c2_i32 = arith.constant 2 : i32
    %67 = vector.broadcast %c2_i32 : i32 to vector<16x8xi32>
    %68 = arith.cmpi sgt, %35, %67 : vector<16x8xi32>
    %69 = arith.andi %66, %68 : vector<16x8xi1>
    %70 = arith.extui %69 : vector<16x8xi1> to vector<16x8xi32>
    %71 = arith.addi %60, %64 : vector<16x8xi32>
    %72 = arith.addi %71, %70 : vector<16x8xi32>
    %73 = vector.extract_strided_slice %34 {offsets = [3, 0], sizes = [1, 8], strides = [1, 1]} : vector<16x8xf32> to vector<1x8xf32>
    %74 = vector.broadcast %73 : vector<1x8xf32> to vector<16x8xf32>
    %75 = arith.cmpf olt, %74, %34 : vector<16x8xf32>
    %76 = arith.extui %75 : vector<16x8xi1> to vector<16x8xi32>
    %77 = vector.broadcast %73 : vector<1x8xf32> to vector<16x8xf32>
    %78 = arith.cmpf oeq, %77, %34 : vector<16x8xf32>
    %c3_i32 = arith.constant 3 : i32
    %79 = vector.broadcast %c3_i32 : i32 to vector<16x8xi32>
    %80 = arith.cmpi sgt, %35, %79 : vector<16x8xi32>
    %81 = arith.andi %78, %80 : vector<16x8xi1>
    %82 = arith.extui %81 : vector<16x8xi1> to vector<16x8xi32>
    %83 = arith.addi %72, %76 : vector<16x8xi32>
    %84 = arith.addi %83, %82 : vector<16x8xi32>
    %85 = vector.extract_strided_slice %34 {offsets = [4, 0], sizes = [1, 8], strides = [1, 1]} : vector<16x8xf32> to vector<1x8xf32>
    %86 = vector.broadcast %85 : vector<1x8xf32> to vector<16x8xf32>
    %87 = arith.cmpf olt, %86, %34 : vector<16x8xf32>
    %88 = arith.extui %87 : vector<16x8xi1> to vector<16x8xi32>
    %89 = vector.broadcast %85 : vector<1x8xf32> to vector<16x8xf32>
    %90 = arith.cmpf oeq, %89, %34 : vector<16x8xf32>
    %c4_i32 = arith.constant 4 : i32
    %91 = vector.broadcast %c4_i32 : i32 to vector<16x8xi32>
    %92 = arith.cmpi sgt, %35, %91 : vector<16x8xi32>
    %93 = arith.andi %90, %92 : vector<16x8xi1>
    %94 = arith.extui %93 : vector<16x8xi1> to vector<16x8xi32>
    %95 = arith.addi %84, %88 : vector<16x8xi32>
    %96 = arith.addi %95, %94 : vector<16x8xi32>
    %97 = vector.extract_strided_slice %34 {offsets = [5, 0], sizes = [1, 8], strides = [1, 1]} : vector<16x8xf32> to vector<1x8xf32>
    %98 = vector.broadcast %97 : vector<1x8xf32> to vector<16x8xf32>
    %99 = arith.cmpf olt, %98, %34 : vector<16x8xf32>
    %100 = arith.extui %99 : vector<16x8xi1> to vector<16x8xi32>
    %101 = vector.broadcast %97 : vector<1x8xf32> to vector<16x8xf32>
    %102 = arith.cmpf oeq, %101, %34 : vector<16x8xf32>
    %c5_i32 = arith.constant 5 : i32
    %103 = vector.broadcast %c5_i32 : i32 to vector<16x8xi32>
    %104 = arith.cmpi sgt, %35, %103 : vector<16x8xi32>
    %105 = arith.andi %102, %104 : vector<16x8xi1>
    %106 = arith.extui %105 : vector<16x8xi1> to vector<16x8xi32>
    %107 = arith.addi %96, %100 : vector<16x8xi32>
    %108 = arith.addi %107, %106 : vector<16x8xi32>
    %109 = vector.extract_strided_slice %34 {offsets = [6, 0], sizes = [1, 8], strides = [1, 1]} : vector<16x8xf32> to vector<1x8xf32>
    %110 = vector.broadcast %109 : vector<1x8xf32> to vector<16x8xf32>
    %111 = arith.cmpf olt, %110, %34 : vector<16x8xf32>
    %112 = arith.extui %111 : vector<16x8xi1> to vector<16x8xi32>
    %113 = vector.broadcast %109 : vector<1x8xf32> to vector<16x8xf32>
    %114 = arith.cmpf oeq, %113, %34 : vector<16x8xf32>
    %c6_i32 = arith.constant 6 : i32
    %115 = vector.broadcast %c6_i32 : i32 to vector<16x8xi32>
    %116 = arith.cmpi sgt, %35, %115 : vector<16x8xi32>
    %117 = arith.andi %114, %116 : vector<16x8xi1>
    %118 = arith.extui %117 : vector<16x8xi1> to vector<16x8xi32>
    %119 = arith.addi %108, %112 : vector<16x8xi32>
    %120 = arith.addi %119, %118 : vector<16x8xi32>
    %121 = vector.extract_strided_slice %34 {offsets = [7, 0], sizes = [1, 8], strides = [1, 1]} : vector<16x8xf32> to vector<1x8xf32>
    %122 = vector.broadcast %121 : vector<1x8xf32> to vector<16x8xf32>
    %123 = arith.cmpf olt, %122, %34 : vector<16x8xf32>
    %124 = arith.extui %123 : vector<16x8xi1> to vector<16x8xi32>
    %125 = vector.broadcast %121 : vector<1x8xf32> to vector<16x8xf32>
    %126 = arith.cmpf oeq, %125, %34 : vector<16x8xf32>
    %c7_i32 = arith.constant 7 : i32
    %127 = vector.broadcast %c7_i32 : i32 to vector<16x8xi32>
    %128 = arith.cmpi sgt, %35, %127 : vector<16x8xi32>
    %129 = arith.andi %126, %128 : vector<16x8xi1>
    %130 = arith.extui %129 : vector<16x8xi1> to vector<16x8xi32>
    %131 = arith.addi %120, %124 : vector<16x8xi32>
    %132 = arith.addi %131, %130 : vector<16x8xi32>
    %133 = vector.extract_strided_slice %34 {offsets = [8, 0], sizes = [1, 8], strides = [1, 1]} : vector<16x8xf32> to vector<1x8xf32>
    %134 = vector.broadcast %133 : vector<1x8xf32> to vector<16x8xf32>
    %135 = arith.cmpf olt, %134, %34 : vector<16x8xf32>
    %136 = arith.extui %135 : vector<16x8xi1> to vector<16x8xi32>
    %137 = vector.broadcast %133 : vector<1x8xf32> to vector<16x8xf32>
    %138 = arith.cmpf oeq, %137, %34 : vector<16x8xf32>
    %c8_i32 = arith.constant 8 : i32
    %139 = vector.broadcast %c8_i32 : i32 to vector<16x8xi32>
    %140 = arith.cmpi sgt, %35, %139 : vector<16x8xi32>
    %141 = arith.andi %138, %140 : vector<16x8xi1>
    %142 = arith.extui %141 : vector<16x8xi1> to vector<16x8xi32>
    %143 = arith.addi %132, %136 : vector<16x8xi32>
    %144 = arith.addi %143, %142 : vector<16x8xi32>
    %145 = vector.extract_strided_slice %34 {offsets = [9, 0], sizes = [1, 8], strides = [1, 1]} : vector<16x8xf32> to vector<1x8xf32>
    %146 = vector.broadcast %145 : vector<1x8xf32> to vector<16x8xf32>
    %147 = arith.cmpf olt, %146, %34 : vector<16x8xf32>
    %148 = arith.extui %147 : vector<16x8xi1> to vector<16x8xi32>
    %149 = vector.broadcast %145 : vector<1x8xf32> to vector<16x8xf32>
    %150 = arith.cmpf oeq, %149, %34 : vector<16x8xf32>
    %c9_i32 = arith.constant 9 : i32
    %151 = vector.broadcast %c9_i32 : i32 to vector<16x8xi32>
    %152 = arith.cmpi sgt, %35, %151 : vector<16x8xi32>
    %153 = arith.andi %150, %152 : vector<16x8xi1>
    %154 = arith.extui %153 : vector<16x8xi1> to vector<16x8xi32>
    %155 = arith.addi %144, %148 : vector<16x8xi32>
    %156 = arith.addi %155, %154 : vector<16x8xi32>
    %157 = vector.extract_strided_slice %34 {offsets = [10, 0], sizes = [1, 8], strides = [1, 1]} : vector<16x8xf32> to vector<1x8xf32>
    %158 = vector.broadcast %157 : vector<1x8xf32> to vector<16x8xf32>
    %159 = arith.cmpf olt, %158, %34 : vector<16x8xf32>
    %160 = arith.extui %159 : vector<16x8xi1> to vector<16x8xi32>
    %161 = vector.broadcast %157 : vector<1x8xf32> to vector<16x8xf32>
    %162 = arith.cmpf oeq, %161, %34 : vector<16x8xf32>
    %c10_i32 = arith.constant 10 : i32
    %163 = vector.broadcast %c10_i32 : i32 to vector<16x8xi32>
    %164 = arith.cmpi sgt, %35, %163 : vector<16x8xi32>
    %165 = arith.andi %162, %164 : vector<16x8xi1>
    %166 = arith.extui %165 : vector<16x8xi1> to vector<16x8xi32>
    %167 = arith.addi %156, %160 : vector<16x8xi32>
    %168 = arith.addi %167, %166 : vector<16x8xi32>
    %169 = vector.extract_strided_slice %34 {offsets = [11, 0], sizes = [1, 8], strides = [1, 1]} : vector<16x8xf32> to vector<1x8xf32>
    %170 = vector.broadcast %169 : vector<1x8xf32> to vector<16x8xf32>
    %171 = arith.cmpf olt, %170, %34 : vector<16x8xf32>
    %172 = arith.extui %171 : vector<16x8xi1> to vector<16x8xi32>
    %173 = vector.broadcast %169 : vector<1x8xf32> to vector<16x8xf32>
    %174 = arith.cmpf oeq, %173, %34 : vector<16x8xf32>
    %c11_i32 = arith.constant 11 : i32
    %175 = vector.broadcast %c11_i32 : i32 to vector<16x8xi32>
    %176 = arith.cmpi sgt, %35, %175 : vector<16x8xi32>
    %177 = arith.andi %174, %176 : vector<16x8xi1>
    %178 = arith.extui %177 : vector<16x8xi1> to vector<16x8xi32>
    %179 = arith.addi %168, %172 : vector<16x8xi32>
    %180 = arith.addi %179, %178 : vector<16x8xi32>
    %181 = vector.extract_strided_slice %34 {offsets = [12, 0], sizes = [1, 8], strides = [1, 1]} : vector<16x8xf32> to vector<1x8xf32>
    %182 = vector.broadcast %181 : vector<1x8xf32> to vector<16x8xf32>
    %183 = arith.cmpf olt, %182, %34 : vector<16x8xf32>
    %184 = arith.extui %183 : vector<16x8xi1> to vector<16x8xi32>
    %185 = vector.broadcast %181 : vector<1x8xf32> to vector<16x8xf32>
    %186 = arith.cmpf oeq, %185, %34 : vector<16x8xf32>
    %c12_i32 = arith.constant 12 : i32
    %187 = vector.broadcast %c12_i32 : i32 to vector<16x8xi32>
    %188 = arith.cmpi sgt, %35, %187 : vector<16x8xi32>
    %189 = arith.andi %186, %188 : vector<16x8xi1>
    %190 = arith.extui %189 : vector<16x8xi1> to vector<16x8xi32>
    %191 = arith.addi %180, %184 : vector<16x8xi32>
    %192 = arith.addi %191, %190 : vector<16x8xi32>
    %193 = vector.extract_strided_slice %34 {offsets = [13, 0], sizes = [1, 8], strides = [1, 1]} : vector<16x8xf32> to vector<1x8xf32>
    %194 = vector.broadcast %193 : vector<1x8xf32> to vector<16x8xf32>
    %195 = arith.cmpf olt, %194, %34 : vector<16x8xf32>
    %196 = arith.extui %195 : vector<16x8xi1> to vector<16x8xi32>
    %197 = vector.broadcast %193 : vector<1x8xf32> to vector<16x8xf32>
    %198 = arith.cmpf oeq, %197, %34 : vector<16x8xf32>
    %c13_i32 = arith.constant 13 : i32
    %199 = vector.broadcast %c13_i32 : i32 to vector<16x8xi32>
    %200 = arith.cmpi sgt, %35, %199 : vector<16x8xi32>
    %201 = arith.andi %198, %200 : vector<16x8xi1>
    %202 = arith.extui %201 : vector<16x8xi1> to vector<16x8xi32>
    %203 = arith.addi %192, %196 : vector<16x8xi32>
    %204 = arith.addi %203, %202 : vector<16x8xi32>
    %205 = vector.extract_strided_slice %34 {offsets = [14, 0], sizes = [1, 8], strides = [1, 1]} : vector<16x8xf32> to vector<1x8xf32>
    %206 = vector.broadcast %205 : vector<1x8xf32> to vector<16x8xf32>
    %207 = arith.cmpf olt, %206, %34 : vector<16x8xf32>
    %208 = arith.extui %207 : vector<16x8xi1> to vector<16x8xi32>
    %209 = vector.broadcast %205 : vector<1x8xf32> to vector<16x8xf32>
    %210 = arith.cmpf oeq, %209, %34 : vector<16x8xf32>
    %c14_i32 = arith.constant 14 : i32
    %211 = vector.broadcast %c14_i32 : i32 to vector<16x8xi32>
    %212 = arith.cmpi sgt, %35, %211 : vector<16x8xi32>
    %213 = arith.andi %210, %212 : vector<16x8xi1>
    %214 = arith.extui %213 : vector<16x8xi1> to vector<16x8xi32>
    %215 = arith.addi %204, %208 : vector<16x8xi32>
    %216 = arith.addi %215, %214 : vector<16x8xi32>
    %217 = vector.extract_strided_slice %34 {offsets = [15, 0], sizes = [1, 8], strides = [1, 1]} : vector<16x8xf32> to vector<1x8xf32>
    %218 = vector.broadcast %217 : vector<1x8xf32> to vector<16x8xf32>
    %219 = arith.cmpf olt, %218, %34 : vector<16x8xf32>
    %220 = arith.extui %219 : vector<16x8xi1> to vector<16x8xi32>
    %221 = vector.broadcast %217 : vector<1x8xf32> to vector<16x8xf32>
    %222 = arith.cmpf oeq, %221, %34 : vector<16x8xf32>
    %c15_i32 = arith.constant 15 : i32
    %223 = vector.broadcast %c15_i32 : i32 to vector<16x8xi32>
    %224 = arith.cmpi sgt, %35, %223 : vector<16x8xi32>
    %225 = arith.andi %222, %224 : vector<16x8xi1>
    %226 = arith.extui %225 : vector<16x8xi1> to vector<16x8xi32>
    %227 = arith.addi %216, %220 : vector<16x8xi32>
    %228 = arith.addi %227, %226 : vector<16x8xi32>
    %cst_18 = arith.constant 0.000000e+00 : f32
    %229 = vector.broadcast %cst_18 : f32 to vector<16x8xf32>
    %c0_i32_19 = arith.constant 0 : i32
    %230 = vector.broadcast %c0_i32_19 : i32 to vector<16x8xi32>
    %231 = arith.cmpi eq, %228, %230 : vector<16x8xi32>
    %cst_20 = arith.constant 0.000000e+00 : f32
    %cst_21 = arith.constant 0.000000e+00 : f32
    %232 = vector.broadcast %cst_20 : f32 to vector<16x8xf32>
    %233 = vector.broadcast %cst_21 : f32 to vector<16x8xf32>
    %234 = arith.select %231, %232, %233 : vector<16x8xi1>, vector<16x8xf32>
    %235 = arith.addf %229, %234 : vector<16x8xf32>
    %c1_i32_22 = arith.constant 1 : i32
    %236 = vector.broadcast %c1_i32_22 : i32 to vector<16x8xi32>
    %237 = arith.cmpi eq, %228, %236 : vector<16x8xi32>
    %cst_23 = arith.constant 0.00114755065 : f32
    %cst_24 = arith.constant 0.000000e+00 : f32
    %238 = vector.broadcast %cst_23 : f32 to vector<16x8xf32>
    %239 = vector.broadcast %cst_24 : f32 to vector<16x8xf32>
    %240 = arith.select %237, %238, %239 : vector<16x8xi1>, vector<16x8xf32>
    %241 = arith.addf %235, %240 : vector<16x8xf32>
    %c2_i32_25 = arith.constant 2 : i32
    %242 = vector.broadcast %c2_i32_25 : i32 to vector<16x8xi32>
    %243 = arith.cmpi eq, %228, %242 : vector<16x8xi32>
    %cst_26 = arith.constant 0.0064915265 : f32
    %cst_27 = arith.constant 0.000000e+00 : f32
    %244 = vector.broadcast %cst_26 : f32 to vector<16x8xf32>
    %245 = vector.broadcast %cst_27 : f32 to vector<16x8xf32>
    %246 = arith.select %243, %244, %245 : vector<16x8xi1>, vector<16x8xf32>
    %247 = arith.addf %241, %246 : vector<16x8xf32>
    %c3_i32_28 = arith.constant 3 : i32
    %248 = vector.broadcast %c3_i32_28 : i32 to vector<16x8xi32>
    %249 = arith.cmpi eq, %228, %248 : vector<16x8xi32>
    %cst_29 = arith.constant 0.0178885441 : f32
    %cst_30 = arith.constant 0.000000e+00 : f32
    %250 = vector.broadcast %cst_29 : f32 to vector<16x8xf32>
    %251 = vector.broadcast %cst_30 : f32 to vector<16x8xf32>
    %252 = arith.select %249, %250, %251 : vector<16x8xi1>, vector<16x8xf32>
    %253 = arith.addf %247, %252 : vector<16x8xf32>
    %c4_i32_31 = arith.constant 4 : i32
    %254 = vector.broadcast %c4_i32_31 : i32 to vector<16x8xi32>
    %255 = arith.cmpi eq, %228, %254 : vector<16x8xi32>
    %cst_32 = arith.constant 0.0367216207 : f32
    %cst_33 = arith.constant 0.000000e+00 : f32
    %256 = vector.broadcast %cst_32 : f32 to vector<16x8xf32>
    %257 = vector.broadcast %cst_33 : f32 to vector<16x8xf32>
    %258 = arith.select %255, %256, %257 : vector<16x8xi1>, vector<16x8xf32>
    %259 = arith.addf %253, %258 : vector<16x8xf32>
    %c5_i32_34 = arith.constant 5 : i32
    %260 = vector.broadcast %c5_i32_34 : i32 to vector<16x8xi32>
    %261 = arith.cmpi eq, %228, %260 : vector<16x8xi32>
    %cst_35 = arith.constant 0.0641500279 : f32
    %cst_36 = arith.constant 0.000000e+00 : f32
    %262 = vector.broadcast %cst_35 : f32 to vector<16x8xf32>
    %263 = vector.broadcast %cst_36 : f32 to vector<16x8xf32>
    %264 = arith.select %261, %262, %263 : vector<16x8xi1>, vector<16x8xf32>
    %265 = arith.addf %259, %264 : vector<16x8xf32>
    %c6_i32_37 = arith.constant 6 : i32
    %266 = vector.broadcast %c6_i32_37 : i32 to vector<16x8xi32>
    %267 = arith.cmpi eq, %228, %266 : vector<16x8xi32>
    %cst_38 = arith.constant 0.101192884 : f32
    %cst_39 = arith.constant 0.000000e+00 : f32
    %268 = vector.broadcast %cst_38 : f32 to vector<16x8xf32>
    %269 = vector.broadcast %cst_39 : f32 to vector<16x8xf32>
    %270 = arith.select %267, %268, %269 : vector<16x8xi1>, vector<16x8xf32>
    %271 = arith.addf %265, %270 : vector<16x8xf32>
    %c7_i32_40 = arith.constant 7 : i32
    %272 = vector.broadcast %c7_i32_40 : i32 to vector<16x8xi32>
    %273 = arith.cmpi eq, %228, %272 : vector<16x8xi32>
    %cst_41 = arith.constant 0.148770541 : f32
    %cst_42 = arith.constant 0.000000e+00 : f32
    %274 = vector.broadcast %cst_41 : f32 to vector<16x8xf32>
    %275 = vector.broadcast %cst_42 : f32 to vector<16x8xf32>
    %276 = arith.select %273, %274, %275 : vector<16x8xi1>, vector<16x8xf32>
    %277 = arith.addf %271, %276 : vector<16x8xf32>
    %c8_i32_43 = arith.constant 8 : i32
    %278 = vector.broadcast %c8_i32_43 : i32 to vector<16x8xi32>
    %279 = arith.cmpi eq, %228, %278 : vector<16x8xi32>
    %cst_44 = arith.constant 0.207728848 : f32
    %cst_45 = arith.constant 0.000000e+00 : f32
    %280 = vector.broadcast %cst_44 : f32 to vector<16x8xf32>
    %281 = vector.broadcast %cst_45 : f32 to vector<16x8xf32>
    %282 = arith.select %279, %280, %281 : vector<16x8xi1>, vector<16x8xf32>
    %283 = arith.addf %277, %282 : vector<16x8xf32>
    %c9_i32_46 = arith.constant 9 : i32
    %284 = vector.broadcast %c9_i32_46 : i32 to vector<16x8xi32>
    %285 = arith.cmpi eq, %228, %284 : vector<16x8xi32>
    %cst_47 = arith.constant 0.278854787 : f32
    %cst_48 = arith.constant 0.000000e+00 : f32
    %286 = vector.broadcast %cst_47 : f32 to vector<16x8xf32>
    %287 = vector.broadcast %cst_48 : f32 to vector<16x8xf32>
    %288 = arith.select %285, %286, %287 : vector<16x8xi1>, vector<16x8xf32>
    %289 = arith.addf %283, %288 : vector<16x8xf32>
    %c10_i32_49 = arith.constant 10 : i32
    %290 = vector.broadcast %c10_i32_49 : i32 to vector<16x8xi32>
    %291 = arith.cmpi eq, %228, %290 : vector<16x8xi32>
    %cst_50 = arith.constant 0.362887383 : f32
    %cst_51 = arith.constant 0.000000e+00 : f32
    %292 = vector.broadcast %cst_50 : f32 to vector<16x8xf32>
    %293 = vector.broadcast %cst_51 : f32 to vector<16x8xf32>
    %294 = arith.select %291, %292, %293 : vector<16x8xi1>, vector<16x8xf32>
    %295 = arith.addf %289, %294 : vector<16x8xf32>
    %c11_i32_52 = arith.constant 11 : i32
    %296 = vector.broadcast %c11_i32_52 : i32 to vector<16x8xi32>
    %297 = arith.cmpi eq, %228, %296 : vector<16x8xi32>
    %cst_53 = arith.constant 0.460525364 : f32
    %cst_54 = arith.constant 0.000000e+00 : f32
    %298 = vector.broadcast %cst_53 : f32 to vector<16x8xf32>
    %299 = vector.broadcast %cst_54 : f32 to vector<16x8xf32>
    %300 = arith.select %297, %298, %299 : vector<16x8xi1>, vector<16x8xf32>
    %301 = arith.addf %295, %300 : vector<16x8xf32>
    %c12_i32_55 = arith.constant 12 : i32
    %302 = vector.broadcast %c12_i32_55 : i32 to vector<16x8xi32>
    %303 = arith.cmpi eq, %228, %302 : vector<16x8xi32>
    %cst_56 = arith.constant 0.572433412 : f32
    %cst_57 = arith.constant 0.000000e+00 : f32
    %304 = vector.broadcast %cst_56 : f32 to vector<16x8xf32>
    %305 = vector.broadcast %cst_57 : f32 to vector<16x8xf32>
    %306 = arith.select %303, %304, %305 : vector<16x8xi1>, vector<16x8xf32>
    %307 = arith.addf %301, %306 : vector<16x8xf32>
    %c13_i32_58 = arith.constant 13 : i32
    %308 = vector.broadcast %c13_i32_58 : i32 to vector<16x8xi32>
    %309 = arith.cmpi eq, %228, %308 : vector<16x8xi32>
    %cst_59 = arith.constant 0.699246407 : f32
    %cst_60 = arith.constant 0.000000e+00 : f32
    %310 = vector.broadcast %cst_59 : f32 to vector<16x8xf32>
    %311 = vector.broadcast %cst_60 : f32 to vector<16x8xf32>
    %312 = arith.select %309, %310, %311 : vector<16x8xi1>, vector<16x8xf32>
    %313 = arith.addf %307, %312 : vector<16x8xf32>
    %c14_i32_61 = arith.constant 14 : i32
    %314 = vector.broadcast %c14_i32_61 : i32 to vector<16x8xi32>
    %315 = arith.cmpi eq, %228, %314 : vector<16x8xi32>
    %cst_62 = arith.constant 0.841573297 : f32
    %cst_63 = arith.constant 0.000000e+00 : f32
    %316 = vector.broadcast %cst_62 : f32 to vector<16x8xf32>
    %317 = vector.broadcast %cst_63 : f32 to vector<16x8xf32>
    %318 = arith.select %315, %316, %317 : vector<16x8xi1>, vector<16x8xf32>
    %319 = arith.addf %313, %318 : vector<16x8xf32>
    %c15_i32_64 = arith.constant 15 : i32
    %320 = vector.broadcast %c15_i32_64 : i32 to vector<16x8xi32>
    %321 = arith.cmpi eq, %228, %320 : vector<16x8xi32>
    %cst_65 = arith.constant 1.000000e+00 : f32
    %cst_66 = arith.constant 0.000000e+00 : f32
    %322 = vector.broadcast %cst_65 : f32 to vector<16x8xf32>
    %323 = vector.broadcast %cst_66 : f32 to vector<16x8xf32>
    %324 = arith.select %321, %322, %323 : vector<16x8xi1>, vector<16x8xf32>
    %325 = arith.addf %319, %324 : vector<16x8xf32>
    %326 = math.sqrt %34 : vector<16x8xf32>
    %327 = arith.subf %326, %325 : vector<16x8xf32>
    %328 = arith.mulf %327, %327 : vector<16x8xf32>
    %cst_67 = arith.constant dense<0.000000e+00> : vector<16xf32>
    %329 = vector.multi_reduction <add>, %328, %cst_67 [1] : vector<16x8xf32> to vector<16xf32>
    %330 = vector.shape_cast %329 : vector<16xf32> to vector<16x1xf32>
    %cst_68 = arith.constant dense<0.000000e+00> : vector<1xf32>
    %331 = vector.multi_reduction <add>, %330, %cst_68 [0] : vector<16x1xf32> to vector<1xf32>
    %332 = vector.shape_cast %331 : vector<1xf32> to vector<1x1xf32>
    %cst_69 = arith.constant 7.812500e-03 : f32
    %333 = vector.broadcast %cst_69 : f32 to vector<1x1xf32>
    %334 = arith.mulf %332, %333 : vector<1x1xf32>
    %c0_70 = arith.constant 0 : index
    %c0_71 = arith.constant 0 : index
    %335 = vector.load %arg2[%c0_70, %c0_71] : memref<1x1xf32, #tpu.memory_space<vmem>>, vector<1x1xf32>
    tpu.vector_store %arg2[%c0_70, %c0_71], %334 {strides = array<i32>} : memref<1x1xf32, #tpu.memory_space<vmem>>, vector<1x1xf32>,
    return
  }
  func.func @transform_0(%arg0: i32) -> (i32, i32, i32) {
    %c0_i32 = arith.constant 0 : i32
    %c0_i32_0 = arith.constant 0 : i32
    %c0_i32_1 = arith.constant 0 : i32
    %c0_i32_2 = arith.constant 0 : i32
    return %c0_i32, %c0_i32_0, %c0_i32_1 : i32, i32, i32
  }
  func.func @transform_1(%arg0: i32) -> (i32, i32) {
    %c0_i32 = arith.constant 0 : i32
    %c0_i32_0 = arith.constant 0 : i32
    %c0_i32_1 = arith.constant 0 : i32
    return %c0_i32, %c0_i32_0 : i32, i32
  }
}

</mosaic_0001>

<llo_original>
// kernel: tpu_custom_call.1
$region0: #{tpu_custom_call.1}
  #allocation0 [shape = 'u32[]', space=smem, size = 0x4, offset = 0x4, fixed_abs, tag = 'smem constant byte address 0x4 - core index']
  #allocation1 [shape = 'u32[144,128]{1,0:T(1,128)}', space=vmem, size = 0x12000, scoped, tag = 'internal scratch']
  %s0 = inlined_call_operand.vmem [shape: f32[3,16,8], index: 0, kind: input, shape index: {}]
  %s1 = inlined_call_operand.hbm [shape: f32[1,1], index: 1, kind: output, shape index: {}]
  %s2 = sld [smem:[#allocation0]]
  $region14: #{tpu_custom_call.1} parent=0
    _
  %s4 = ssub.s32 1, %s2
  %s5 = scalar_select 0, %s4, %s2
  $region1: #{tpu_custom_call.1} parent=0
    #allocation2 [shape = 'u8[512]{0}', space=vmem, size = 0x400, scoped, tag = 'output window, operand 0, single buffered']
    #allocation3 [shape = 's32[1]{0}', space=sflag, size = 0x4, scoped, tag = 'scoped memory for tpu_custom_call.1']
    %6 = vsyncpa [#allocation3], 0
    // Predicated region
    $region2: #{tpu_custom_call.1} parent=1 // pred_check
      _
    $region3: #{tpu_custom_call.1} parent=1 // pred_check_branch
      %8 = sbr.rel (0) target = $region5
    $region4: #{tpu_custom_call.1} parent=1 // pred_region
      _
    $region5: #{tpu_custom_call.1} parent=1 // pred_fallthru
      _
    %v9 = vld [vmem:[%s0] sm:$0xff]
    %v10 = vld [vmem:[%s0 + $0x8] sm:$0xff]
    %s11 = scalar_lea.vmem %s0, 16
    %v12 = vld [vmem:[%s11] sm:$0xff]
    %v13 = vld [vmem:[%s11 + $0x8] sm:$0xff]
    %s14 = scalar_lea.vmem %s0, 32
    %v15 = vld [vmem:[%s14] sm:$0xff]
    %v16 = vld [vmem:[%s14 + $0x8] sm:$0xff]
    %v17 = vmul.f32 %v9, 0.5
    %v18 = vmul.f32 %v10, 0.5
    %v19 = vmax.f32 %v17, 0.0
    %v20 = vmax.f32 %v18, 0.0
    %v21 = vmin.f32 %v19, 1.0
    %v22 = vmin.f32 %v20, 1.0
    %v23 = vmul.f32 %v12, 0.5
    %v24 = vmul.f32 %v13, 0.5
    %v25 = vmax.f32 %v23, 0.0
    %v26 = vmax.f32 %v24, 0.0
    %v27 = vmin.f32 %v25, 1.0
    %v28 = vmin.f32 %v26, 1.0
    %v29 = vmul.f32 %v15, 0.5
    %v30 = vmul.f32 %v16, 0.5
    %v31 = vmax.f32 %v29, 0.0
    %v32 = vmax.f32 %v30, 0.0
    %v33 = vmin.f32 %v31, 1.0
    %v34 = vmin.f32 %v32, 1.0
    %v35 = vmul.f32 %v21, 0.299
    %v36 = vmul.f32 %v22, 0.299
    %v37 = vmul.f32 %v35, %v21
    %v38 = vmul.f32 %v36, %v22
    %v39 = vmul.f32 %v27, 0.587
    %v40 = vmul.f32 %v28, 0.587
    %v41 = vmul.f32 %v39, %v27
    %v42 = vmul.f32 %v40, %v28
    %v43 = vadd.f32 %v37, %v41
    %v44 = vadd.f32 %v38, %v42
    %v45 = vmul.f32 %v33, 0.114
    %v46 = vmul.f32 %v34, 0.114
    %v47 = vmul.f32 %v45, %v33
    %v48 = vmul.f32 %v46, %v34
    %v49 = vadd.f32 %v43, %v47
    %v50 = vadd.f32 %v44, %v48
    %v51 = vlaneseq
    %v52 = vshrl.u32 %v51, 7
    %v53 = vadd.s32 %v52, 8
    %v54 = vlaneseq
    %v55 = vshrl.u32 %v54, 7
    %v56 = vsub.s32 0, %v55
    %v57 = vrot.slane %v49, %v56
    %vm58 = vcmp.lt.f32.partialorder %v57, %v49
    %vm59 = vcmp.lt.f32.partialorder %v57, %v50
    %v60 = vsel %vm58, 1, 0
    %v61 = vsel %vm59, 1, 0
    %vm62 = vcmp.eq.f32.partialorder %v57, %v49
    %vm63 = vcmp.eq.f32.partialorder %v57, %v50
    %vm64 = vcmp.gt.s32.totalorder %v52, 0
    %vm65 = vcmp.gt.s32.totalorder %v53, 0
    %vm66 = vmand %vm62, %vm64
    %vm67 = vmand %vm63, %vm65
    %v68 = vsel %vm66, 1, 0
    %v69 = vsel %vm67, 1, 0
    %v70 = vadd.s32 %v60, %v68
    %v71 = vadd.s32 %v61, %v69
    %v72 = vlaneseq
    %v73 = vshrl.u32 %v72, 7
    %v74 = vsub.s32 1, %v73
    %v75 = vrot.slane %v49, %v74
    %vm76 = vcmp.lt.f32.partialorder %v75, %v49
    %vm77 = vcmp.lt.f32.partialorder %v75, %v50
    %v78 = vsel %vm76, 1, 0
    %v79 = vsel %vm77, 1, 0
    %vm80 = vcmp.eq.f32.partialorder %v75, %v49
    %vm81 = vcmp.eq.f32.partialorder %v75, %v50
    %vm82 = vcmp.gt.s32.totalorder %v52, 1
    %vm83 = vcmp.gt.s32.totalorder %v53, 1
    %vm84 = vmand %vm80, %vm82
    %vm85 = vmand %vm81, %vm83
    %v86 = vsel %vm84, 1, 0
    %v87 = vsel %vm85, 1, 0
    %v88 = vadd.s32 %v70, %v78
    %v89 = vadd.s32 %v71, %v79
    %v90 = vadd.s32 %v88, %v86
    %v91 = vadd.s32 %v89, %v87
    %v92 = vlaneseq
    %v93 = vshrl.u32 %v92, 7
    %v94 = vsub.s32 2, %v93
    %v95 = vrot.slane %v49, %v94
    %vm96 = vcmp.lt.f32.partialorder %v95, %v49
    %vm97 = vcmp.lt.f32.partialorder %v95, %v50
    %v98 = vsel %vm96, 1, 0
    %v99 = vsel %vm97, 1, 0
    %vm100 = vcmp.eq.f32.partialorder %v95, %v49
    %vm101 = vcmp.eq.f32.partialorder %v95, %v50
    %vm102 = vcmp.gt.s32.totalorder %v52, 2
    %vm103 = vcmp.gt.s32.totalorder %v53, 2
    %vm104 = vmand %vm100, %vm102
    %vm105 = vmand %vm101, %vm103
    %v106 = vsel %vm104, 1, 0
    %v107 = vsel %vm105, 1, 0
    %v108 = vadd.s32 %v90, %v98
    %v109 = vadd.s32 %v91, %v99
    %v110 = vadd.s32 %v108, %v106
    %v111 = vadd.s32 %v109, %v107
    %v112 = vlaneseq
    %v113 = vshrl.u32 %v112, 7
    %v114 = vsub.s32 3, %v113
    %v115 = vrot.slane %v49, %v114
    %vm116 = vcmp.lt.f32.partialorder %v115, %v49
    %vm117 = vcmp.lt.f32.partialorder %v115, %v50
    %v118 = vsel %vm116, 1, 0
    %v119 = vsel %vm117, 1, 0
    %vm120 = vcmp.eq.f32.partialorder %v115, %v49
    %vm121 = vcmp.eq.f32.partialorder %v115, %v50
    %vm122 = vcmp.gt.s32.totalorder %v52, 3
    %vm123 = vcmp.gt.s32.totalorder %v53, 3
    %vm124 = vmand %vm120, %vm122
    %vm125 = vmand %vm121, %vm123
    %v126 = vsel %vm124, 1, 0
    %v127 = vsel %vm125, 1, 0
    %v128 = vadd.s32 %v110, %v118
    %v129 = vadd.s32 %v111, %v119
    %v130 = vadd.s32 %v128, %v126
    %v131 = vadd.s32 %v129, %v127
    %v132 = vlaneseq
    %v133 = vshrl.u32 %v132, 7
    %v134 = vsub.s32 4, %v133
    %v135 = vrot.slane %v49, %v134
    %vm136 = vcmp.lt.f32.partialorder %v135, %v49
    %vm137 = vcmp.lt.f32.partialorder %v135, %v50
    %v138 = vsel %vm136, 1, 0
    %v139 = vsel %vm137, 1, 0
    %vm140 = vcmp.eq.f32.partialorder %v135, %v49
    %vm141 = vcmp.eq.f32.partialorder %v135, %v50
    %vm142 = vcmp.gt.s32.totalorder %v52, 4
    %vm143 = vcmp.gt.s32.totalorder %v53, 4
    %vm144 = vmand %vm140, %vm142
    %vm145 = vmand %vm141, %vm143
    %v146 = vsel %vm144, 1, 0
    %v147 = vsel %vm145, 1, 0
    %v148 = vadd.s32 %v130, %v138
    %v149 = vadd.s32 %v131, %v139
    %v150 = vadd.s32 %v148, %v146
    %v151 = vadd.s32 %v149, %v147
    %v152 = vlaneseq
    %v153 = vshrl.u32 %v152, 7
    %v154 = vsub.s32 5, %v153
    %v155 = vrot.slane %v49, %v154
    %vm156 = vcmp.lt.f32.partialorder %v155, %v49
    %vm157 = vcmp.lt.f32.partialorder %v155, %v50
    %v158 = vsel %vm156, 1, 0
    %v159 = vsel %vm157, 1, 0
    %vm160 = vcmp.eq.f32.partialorder %v155, %v49
    %vm161 = vcmp.eq.f32.partialorder %v155, %v50
    %vm162 = vcmp.gt.s32.totalorder %v52, 5
    %vm163 = vcmp.gt.s32.totalorder %v53, 5
    %vm164 = vmand %vm160, %vm162
    %vm165 = vmand %vm161, %vm163
    %v166 = vsel %vm164, 1, 0
    %v167 = vsel %vm165, 1, 0
    %v168 = vadd.s32 %v150, %v158
    %v169 = vadd.s32 %v151, %v159
    %v170 = vadd.s32 %v168, %v166
    %v171 = vadd.s32 %v169, %v167
    %v172 = vlaneseq
    %v173 = vshrl.u32 %v172, 7
    %v174 = vsub.s32 6, %v173
    %v175 = vrot.slane %v49, %v174
    %vm176 = vcmp.lt.f32.partialorder %v175, %v49
    %vm177 = vcmp.lt.f32.partialorder %v175, %v50
    %v178 = vsel %vm176, 1, 0
    %v179 = vsel %vm177, 1, 0
    %vm180 = vcmp.eq.f32.partialorder %v175, %v49
    %vm181 = vcmp.eq.f32.partialorder %v175, %v50
    %vm182 = vcmp.gt.s32.totalorder %v52, 6
    %vm183 = vcmp.gt.s32.totalorder %v53, 6
    %vm184 = vmand %vm180, %vm182
    %vm185 = vmand %vm181, %vm183
    %v186 = vsel %vm184, 1, 0
    %v187 = vsel %vm185, 1, 0
    %v188 = vadd.s32 %v170, %v178
    %v189 = vadd.s32 %v171, %v179
    %v190 = vadd.s32 %v188, %v186
    %v191 = vadd.s32 %v189, %v187
    %v192 = vlaneseq
    %v193 = vshrl.u32 %v192, 7
    %v194 = vsub.s32 7, %v193
    %v195 = vrot.slane %v49, %v194
    %vm196 = vcmp.lt.f32.partialorder %v195, %v49
    %vm197 = vcmp.lt.f32.partialorder %v195, %v50
    %v198 = vsel %vm196, 1, 0
    %v199 = vsel %vm197, 1, 0
    %vm200 = vcmp.eq.f32.partialorder %v195, %v49
    %vm201 = vcmp.eq.f32.partialorder %v195, %v50
    %vm202 = vcmp.gt.s32.totalorder %v52, 7
    %vm203 = vcmp.gt.s32.totalorder %v53, 7
    %vm204 = vmand %vm200, %vm202
    %vm205 = vmand %vm201, %vm203
    %v206 = vsel %vm204, 1, 0
    %v207 = vsel %vm205, 1, 0
    %v208 = vadd.s32 %v190, %v198
    %v209 = vadd.s32 %v191, %v199
    %v210 = vadd.s32 %v208, %v206
    %v211 = vadd.s32 %v209, %v207
    %v212 = vlaneseq
    %v213 = vshrl.u32 %v212, 7
    %v214 = vsub.s32 0, %v213
    %v215 = vrot.slane %v50, %v214
    %vm216 = vcmp.lt.f32.partialorder %v215, %v49
    %vm217 = vcmp.lt.f32.partialorder %v215, %v50
    %v218 = vsel %vm216, 1, 0
    %v219 = vsel %vm217, 1, 0
    %vm220 = vcmp.eq.f32.partialorder %v215, %v49
    %vm221 = vcmp.eq.f32.partialorder %v215, %v50
    %vm222 = vcmp.gt.s32.totalorder %v52, 8
    %vm223 = vcmp.gt.s32.totalorder %v53, 8
    %vm224 = vmand %vm220, %vm222
    %vm225 = vmand %vm221, %vm223
    %v226 = vsel %vm224, 1, 0
    %v227 = vsel %vm225, 1, 0
    %v228 = vadd.s32 %v210, %v218
    %v229 = vadd.s32 %v211, %v219
    %v230 = vadd.s32 %v228, %v226
    %v231 = vadd.s32 %v229, %v227
    %v232 = vlaneseq
    %v233 = vshrl.u32 %v232, 7
    %v234 = vsub.s32 1, %v233
    %v235 = vrot.slane %v50, %v234
    %vm236 = vcmp.lt.f32.partialorder %v235, %v49
    %vm237 = vcmp.lt.f32.partialorder %v235, %v50
    %v238 = vsel %vm236, 1, 0
    %v239 = vsel %vm237, 1, 0
    %vm240 = vcmp.eq.f32.partialorder %v235, %v49
    %vm241 = vcmp.eq.f32.partialorder %v235, %v50
    %vm242 = vcmp.gt.s32.totalorder %v52, 9
    %vm243 = vcmp.gt.s32.totalorder %v53, 9
    %vm244 = vmand %vm240, %vm242
    %vm245 = vmand %vm241, %vm243
    %v246 = vsel %vm244, 1, 0
    %v247 = vsel %vm245, 1, 0
    %v248 = vadd.s32 %v230, %v238
    %v249 = vadd.s32 %v231, %v239
    %v250 = vadd.s32 %v248, %v246
    %v251 = vadd.s32 %v249, %v247
    %v252 = vlaneseq
    %v253 = vshrl.u32 %v252, 7
    %v254 = vsub.s32 2, %v253
    %v255 = vrot.slane %v50, %v254
    %vm256 = vcmp.lt.f32.partialorder %v255, %v49
    %vm257 = vcmp.lt.f32.partialorder %v255, %v50
    %v258 = vsel %vm256, 1, 0
    %v259 = vsel %vm257, 1, 0
    %vm260 = vcmp.eq.f32.partialorder %v255, %v49
    %vm261 = vcmp.eq.f32.partialorder %v255, %v50
    %vm262 = vcmp.gt.s32.totalorder %v52, 10
    %vm263 = vcmp.gt.s32.totalorder %v53, 10
    %vm264 = vmand %vm260, %vm262
    %vm265 = vmand %vm261, %vm263
    %v266 = vsel %vm264, 1, 0
    %v267 = vsel %vm265, 1, 0
    %v268 = vadd.s32 %v250, %v258
    %v269 = vadd.s32 %v251, %v259
    %v270 = vadd.s32 %v268, %v266
    %v271 = vadd.s32 %v269, %v267
    %v272 = vlaneseq
    %v273 = vshrl.u32 %v272, 7
    %v274 = vsub.s32 3, %v273
    %v275 = vrot.slane %v50, %v274
    %vm276 = vcmp.lt.f32.partialorder %v275, %v49
    %vm277 = vcmp.lt.f32.partialorder %v275, %v50
    %v278 = vsel %vm276, 1, 0
    %v279 = vsel %vm277, 1, 0
    %vm280 = vcmp.eq.f32.partialorder %v275, %v49
    %vm281 = vcmp.eq.f32.partialorder %v275, %v50
    %vm282 = vcmp.gt.s32.totalorder %v52, 11
    %vm283 = vcmp.gt.s32.totalorder %v53, 11
    %vm284 = vmand %vm280, %vm282
    %vm285 = vmand %vm281, %vm283
    %v286 = vsel %vm284, 1, 0
    %v287 = vsel %vm285, 1, 0
    %v288 = vadd.s32 %v270, %v278
    %v289 = vadd.s32 %v271, %v279
    %v290 = vadd.s32 %v288, %v286
    %v291 = vadd.s32 %v289, %v287
    %v292 = vlaneseq
    %v293 = vshrl.u32 %v292, 7
    %v294 = vsub.s32 4, %v293
    %v295 = vrot.slane %v50, %v294
    %vm296 = vcmp.lt.f32.partialorder %v295, %v49
    %vm297 = vcmp.lt.f32.partialorder %v295, %v50
    %v298 = vsel %vm296, 1, 0
    %v299 = vsel %vm297, 1, 0
    %vm300 = vcmp.eq.f32.partialorder %v295, %v49
    %vm301 = vcmp.eq.f32.partialorder %v295, %v50
    %vm302 = vcmp.gt.s32.totalorder %v52, 12
    %vm303 = vcmp.gt.s32.totalorder %v53, 12
    %vm304 = vmand %vm300, %vm302
    %vm305 = vmand %vm301, %vm303
    %v306 = vsel %vm304, 1, 0
    %v307 = vsel %vm305, 1, 0
    %v308 = vadd.s32 %v290, %v298
    %v309 = vadd.s32 %v291, %v299
    %v310 = vadd.s32 %v308, %v306
    %v311 = vadd.s32 %v309, %v307
    %v312 = vlaneseq
    %v313 = vshrl.u32 %v312, 7
    %v314 = vsub.s32 5, %v313
    %v315 = vrot.slane %v50, %v314
    %vm316 = vcmp.lt.f32.partialorder %v315, %v49
    %vm317 = vcmp.lt.f32.partialorder %v315, %v50
    %v318 = vsel %vm316, 1, 0
    %v319 = vsel %vm317, 1, 0
    %vm320 = vcmp.eq.f32.partialorder %v315, %v49
    %vm321 = vcmp.eq.f32.partialorder %v315, %v50
    %vm322 = vcmp.gt.s32.totalorder %v52, 13
    %vm323 = vcmp.gt.s32.totalorder %v53, 13
    %vm324 = vmand %vm320, %vm322
    %vm325 = vmand %vm321, %vm323
    %v326 = vsel %vm324, 1, 0
    %v327 = vsel %vm325, 1, 0
    %v328 = vadd.s32 %v310, %v318
    %v329 = vadd.s32 %v311, %v319
    %v330 = vadd.s32 %v328, %v326
    %v331 = vadd.s32 %v329, %v327
    %v332 = vlaneseq
    %v333 = vshrl.u32 %v332, 7
    %v334 = vsub.s32 6, %v333
    %v335 = vrot.slane %v50, %v334
    %vm336 = vcmp.lt.f32.partialorder %v335, %v49
    %vm337 = vcmp.lt.f32.partialorder %v335, %v50
    %v338 = vsel %vm336, 1, 0
    %v339 = vsel %vm337, 1, 0
    %vm340 = vcmp.eq.f32.partialorder %v335, %v49
    %vm341 = vcmp.eq.f32.partialorder %v335, %v50
    %vm342 = vcmp.gt.s32.totalorder %v52, 14
    %vm343 = vcmp.gt.s32.totalorder %v53, 14
    %vm344 = vmand %vm340, %vm342
    %vm345 = vmand %vm341, %vm343
    %v346 = vsel %vm344, 1, 0
    %v347 = vsel %vm345, 1, 0
    %v348 = vadd.s32 %v330, %v338
    %v349 = vadd.s32 %v331, %v339
    %v350 = vadd.s32 %v348, %v346
    %v351 = vadd.s32 %v349, %v347
    %v352 = vlaneseq
    %v353 = vshrl.u32 %v352, 7
    %v354 = vsub.s32 7, %v353
    %v355 = vrot.slane %v50, %v354
    %vm356 = vcmp.lt.f32.partialorder %v355, %v49
    %vm357 = vcmp.lt.f32.partialorder %v355, %v50
    %v358 = vsel %vm356, 1, 0
    %v359 = vsel %vm357, 1, 0
    %vm360 = vcmp.eq.f32.partialorder %v355, %v49
    %vm361 = vcmp.eq.f32.partialorder %v355, %v50
    %vm362 = vcmp.gt.s32.totalorder %v52, 15
    %vm363 = vcmp.gt.s32.totalorder %v53, 15
    %vm364 = vmand %vm360, %vm362
    %vm365 = vmand %vm361, %vm363
    %v366 = vsel %vm364, 1, 0
    %v367 = vsel %vm365, 1, 0
    %v368 = vadd.s32 %v350, %v358
    %v369 = vadd.s32 %v351, %v359
    %v370 = vadd.s32 %v368, %v366
    %v371 = vadd.s32 %v369, %v367
    %vm372 = vcmp.eq.s32.totalorder %v370, 1
    %vm373 = vcmp.eq.s32.totalorder %v371, 1
    %v374 = vsel %vm372, 0.0011475506, 0.0
    %v375 = vsel %vm373, 0.0011475506, 0.0
    %v376 = vadd.f32 %v374, 0.0
    %v377 = vadd.f32 %v375, 0.0
    %vm378 = vcmp.eq.s32.totalorder %v370, 2
    %vm379 = vcmp.eq.s32.totalorder %v371, 2
    %v380 = vsel %vm378, 0.0064915265, 0.0
    %v381 = vsel %vm379, 0.0064915265, 0.0
    %v382 = vadd.f32 %v376, %v380
    %v383 = vadd.f32 %v377, %v381
    %vm384 = vcmp.eq.s32.totalorder %v370, 3
    %vm385 = vcmp.eq.s32.totalorder %v371, 3
    %v386 = vsel %vm384, 0.017888544, 0.0
    %v387 = vsel %vm385, 0.017888544, 0.0
    %v388 = vadd.f32 %v382, %v386
    %v389 = vadd.f32 %v383, %v387
    %vm390 = vcmp.eq.s32.totalorder %v370, 4
    %vm391 = vcmp.eq.s32.totalorder %v371, 4
    %v392 = vsel %vm390, 0.03672162, 0.0
    %v393 = vsel %vm391, 0.03672162, 0.0
    %v394 = vadd.f32 %v388, %v392
    %v395 = vadd.f32 %v389, %v393
    %vm396 = vcmp.eq.s32.totalorder %v370, 5
    %vm397 = vcmp.eq.s32.totalorder %v371, 5
    %v398 = vsel %vm396, 0.06415003, 0.0
    %v399 = vsel %vm397, 0.06415003, 0.0
    %v400 = vadd.f32 %v394, %v398
    %v401 = vadd.f32 %v395, %v399
    %vm402 = vcmp.eq.s32.totalorder %v370, 6
    %vm403 = vcmp.eq.s32.totalorder %v371, 6
    %v404 = vsel %vm402, 0.101192884, 0.0
    %v405 = vsel %vm403, 0.101192884, 0.0
    %v406 = vadd.f32 %v400, %v404
    %v407 = vadd.f32 %v401, %v405
    %vm408 = vcmp.eq.s32.totalorder %v370, 7
    %vm409 = vcmp.eq.s32.totalorder %v371, 7
    %v410 = vsel %vm408, 0.14877054, 0.0
    %v411 = vsel %vm409, 0.14877054, 0.0
    %v412 = vadd.f32 %v406, %v410
    %v413 = vadd.f32 %v407, %v411
    %vm414 = vcmp.eq.s32.totalorder %v370, 8
    %vm415 = vcmp.eq.s32.totalorder %v371, 8
    %v416 = vsel %vm414, 0.20772885, 0.0
    %v417 = vsel %vm415, 0.20772885, 0.0
    %v418 = vadd.f32 %v412, %v416
    %v419 = vadd.f32 %v413, %v417
    %vm420 = vcmp.eq.s32.totalorder %v370, 9
    %vm421 = vcmp.eq.s32.totalorder %v371, 9
    %v422 = vsel %vm420, 0.2788548, 0.0
    %v423 = vsel %vm421, 0.2788548, 0.0
    %v424 = vadd.f32 %v418, %v422
    %v425 = vadd.f32 %v419, %v423
    %vm426 = vcmp.eq.s32.totalorder %v370, 10
    %vm427 = vcmp.eq.s32.totalorder %v371, 10
    %v428 = vsel %vm426, 0.36288738, 0.0
    %v429 = vsel %vm427, 0.36288738, 0.0
    %v430 = vadd.f32 %v424, %v428
    %v431 = vadd.f32 %v425, %v429
    %vm432 = vcmp.eq.s32.totalorder %v370, 11
    %vm433 = vcmp.eq.s32.totalorder %v371, 11
    %v434 = vsel %vm432, 0.46052536, 0.0
    %v435 = vsel %vm433, 0.46052536, 0.0
    %v436 = vadd.f32 %v430, %v434
    %v437 = vadd.f32 %v431, %v435
    %vm438 = vcmp.eq.s32.totalorder %v370, 12
    %vm439 = vcmp.eq.s32.totalorder %v371, 12
    %v440 = vsel %vm438, 0.5724334, 0.0
    %v441 = vsel %vm439, 0.5724334, 0.0
    %v442 = vadd.f32 %v436, %v440
    %v443 = vadd.f32 %v437, %v441
    %vm444 = vcmp.eq.s32.totalorder %v370, 13
    %vm445 = vcmp.eq.s32.totalorder %v371, 13
    %v446 = vsel %vm444, 0.6992464, 0.0
    %v447 = vsel %vm445, 0.6992464, 0.0
    %v448 = vadd.f32 %v442, %v446
    %v449 = vadd.f32 %v443, %v447
    %vm450 = vcmp.eq.s32.totalorder %v370, 14
    %vm451 = vcmp.eq.s32.totalorder %v371, 14
    %v452 = vsel %vm450, 0.8415733, 0.0
    %v453 = vsel %vm451, 0.8415733, 0.0
    %v454 = vadd.f32 %v448, %v452
    %v455 = vadd.f32 %v449, %v453
    %vm456 = vcmp.eq.s32.totalorder %v370, 15
    %vm457 = vcmp.eq.s32.totalorder %v371, 15
    %v458 = vsel %vm456, 1.0, 0.0
    %v459 = vsel %vm457, 1.0, 0.0
    %v460 = vadd.f32 %v454, %v458
    %v461 = vadd.f32 %v455, %v459
    %v462 = vrsqrt.pop %v49
    %v463 = vmul.f32 %v49, %v462
    %vm464 = vcmp.eq.f32.partialorder %v49, inf
    %v465 = vsel %vm464, %v49, %v463
    %vm466 = vcmp.eq.f32.partialorder %v49, 0.0
    %v467 = vand.u32 %v49, 2147483648
    %v468 = vsel %vm466, %v467, %v465
    %v469 = vrsqrt.pop %v50
    %v470 = vmul.f32 %v50, %v469
    %vm471 = vcmp.eq.f32.partialorder %v50, inf
    %v472 = vsel %vm471, %v50, %v470
    %vm473 = vcmp.eq.f32.partialorder %v50, 0.0
    %v474 = vand.u32 %v50, 2147483648
    %v475 = vsel %vm473, %v474, %v472
    %v476 = vsub.f32 %v468, %v460
    %v477 = vsub.f32 %v475, %v461
    %v478 = vmul.f32 %v476, %v476
    %v479 = vmul.f32 %v477, %v477
    %vm480 = vcmask 64512
    %v481 = vsel %vm480, %v478, 0.0
    %482 = vadd.xlane.f32.xlu0 %v481
    %v483 = vpop.xlane.xlu0 %482
    %v484 = vsel %vm480, %v479, 0.0
    %485 = vadd.xlane.f32.xlu0 %v484
    %v486 = vpop.xlane.xlu0 %485
    %v487 = vadd.f32 %v483, %v486
    %v488 = vrot.slane %v487, 4
    %v489 = vadd.f32 %v487, %v488
    %v490 = vrot.slane %v489, 2
    %v491 = vadd.f32 %v489, %v490
    %v492 = vrot.slane %v491, 1
    %v493 = vadd.f32 %v491, %v492
    %v494 = vmul.f32 %v493, 0.0078125
    %vm495 = vcmask 0
    %496 = vst.msk [vmem:[#allocation2] sm:$0x1] %vm495, %v494
    // Predicated region
    $region6: #{tpu_custom_call.1} parent=1 // pred_check
      _
    $region7: #{tpu_custom_call.1} parent=1 // pred_check_branch
      %498 = sbr.rel (0) target = $region9
    $region8: #{tpu_custom_call.1} parent=1 // pred_region
      %s500 = ssub.s32 16, 16
      %501 = vsyncadd [#allocation3], %s500
      %s503 = sshll.u32 [#allocation2], 4
      %s504 = int_to_ptr.vmem [resolvable:$true] %s503
      %506 = dma.vmem_to_hbm [thread:$0]  %s504, 16, %s1, [#allocation3]
    $region9: #{tpu_custom_call.1} parent=1 // pred_fallthru
      _
    // Predicated region
    $region10: #{tpu_custom_call.1} parent=1 // pred_check
      _
    $region11: #{tpu_custom_call.1} parent=1 // pred_check_branch
      %508 = sbr.rel (0) target = $region13
    $region12: #{tpu_custom_call.1} parent=1 // pred_region
      %509 = dma.done [#allocation3], 16
    $region13: #{tpu_custom_call.1} parent=1 // pred_fallthru
      _
    %510 = vsyncpa [#allocation3], 1

</llo_original>
